<compile_context>
chip_gen: v7x
topology: tpu7x:2x2x1
jax: 0.10.0
libtpu: 0.0.40
codegen_flags: <defaults>
</compile_context>

<pallas_src>
import numpy as np
import jax
import jax.numpy as jnp
from jax.experimental import pallas as pl
from jax.experimental.pallas import tpu as pltpu

DILATIONS = [1, 2, 4, 8, 16, 32, 64, 128, 256, 512, 1024]
NBLK = len(DILATIONS)
KSIZE = 5
NCH = 20          # real channel count (module spec)
CP = 32           # padded channel count (dense f32/bf16 sublane tiles)


def _round_up(v, m):
    return ((v + m - 1) // m) * m


# ----------------------------- in-kernel helpers -----------------------------
def _elu(v):
    return jnp.where(v > 0, v, jnp.exp(jnp.minimum(v, 0.0)) - 1.0)


def _sigmoid(v):
    # numerically stable sigmoid (EUP tanh), avoids exp overflow
    return 0.5 * (jnp.tanh(0.5 * v) + 1.0)


# --------------------- frontend: conv2d + ELU + maxpool(1,3) -----------------
def conv_pool_kernel(w_ref, b_ref, p0_ref, p1_ref, p2_ref, o_ref):
    # out = ELU(max_k(W @ patches_k) + b)  ==  maxpool(1,3)(ELU(conv2d(x)+b))
    w = w_ref[...]
    m = jnp.dot(w, p0_ref[...], preferred_element_type=jnp.float32)
    m = jnp.maximum(m, jnp.dot(w, p1_ref[...], preferred_element_type=jnp.float32))
    m = jnp.maximum(m, jnp.dot(w, p2_ref[...], preferred_element_type=jnp.float32))
    o_ref[...] = _elu(m + b_ref[...])


def conv_pool_stage(w, b, x3, kh, kw):
    """x3: (C, H, W) f32 -> pooled activations (CP, Ho*Wp) f32 (+ Ho, Wp)."""
    C, H, W = x3.shape
    Ho, Wo = H - kh + 1, W - kw + 1
    Wp = Wo // 3                      # MaxPool2d((1,3)) floor behavior
    L = Ho * Wp
    CO, Kp = w.shape

    # im2col, one patch matrix per pool offset; row order = (c, dh, dw)
    pats = []
    for koff in range(3):
        sl = []
        for dh in range(kh):
            for dw in range(kw):
                sl.append(x3[:, dh:dh + Ho, dw + koff: dw + koff + 3 * Wp: 3])
        arr = jnp.stack(sl, axis=1).reshape(C * kh * kw, L)
        arr = jnp.pad(arr, ((0, Kp - C * kh * kw), (0, 0)))
        pats.append(arr)

    # lane-dense column tiling (multiple of 128), pipelined + megacore-parallel
    tile = min(512, _round_up(L, 128))
    Lp = _round_up(L, tile)
    pats = [jnp.pad(a, ((0, 0), (0, Lp - L))).astype(jnp.bfloat16) for a in pats]

    wspec = pl.BlockSpec((CO, Kp), lambda j: (0, 0))
    bspec = pl.BlockSpec((CO, 1), lambda j: (0, 0))
    pspec = pl.BlockSpec((Kp, tile), lambda j: (0, j))
    ospec = pl.BlockSpec((CO, tile), lambda j: (0, j))

    out = pl.pallas_call(
        conv_pool_kernel,
        out_shape=jax.ShapeDtypeStruct((CO, Lp), jnp.float32),
        grid=(Lp // tile,),
        in_specs=[wspec, bspec, pspec, pspec, pspec],
        out_specs=ospec,
        compiler_params=pltpu.CompilerParams(
            dimension_semantics=("parallel",),
            vmem_limit_bytes=32 * 1024 * 1024),
    )(w, b, pats[0], pats[1], pats[2])
    return out[:, :L], Ho, Wp


# ------------------------- TCN + heads (single kernel) ------------------------
def tcn_kernel(x_ref, w1_ref, b1_ref, w2_ref, b2_ref, wmr_ref, bmr_ref,
               hw_ref, hb_ref, out_ref):
    _, L = x_ref.shape
    # lane-index iota, hoisted once and reused for every shift mask
    ids = jax.lax.broadcasted_iota(jnp.int32, (1, L), 1)

    def shifted(xb, s):
        # y[:, t] = xb[:, t + s], zero-padded ('same' conv1d semantics)
        if abs(s) >= L:
            return jnp.zeros_like(xb)
        if s == 0:
            return xb
        r = pltpu.roll(xb, shift=(-s) % L, axis=1)       # XLU, not MXU
        mask = (ids < (L - s)) if s > 0 else (ids >= (-s))
        return jnp.where(mask, r, jnp.zeros_like(r))

    x = x_ref[...]                                        # (CP, L) f32
    for i, d in enumerate(DILATIONS):                     # keep static unroll
        xb = x.astype(jnp.bfloat16)
        # fuse the 5 taps of each dilated conv into one (CP, 5*CP)@(5*CP, L) dot
        stack1 = jnp.concatenate(
            [shifted(xb, (k - 2) * d) for k in range(KSIZE)], axis=0)
        stack2 = jnp.concatenate(
            [shifted(xb, (k - 2) * 2 * d) for k in range(KSIZE)], axis=0)
        c1 = _elu(jnp.dot(w1_ref[i], stack1,
                          preferred_element_type=jnp.float32) + b1_ref[i])
        c2 = _elu(jnp.dot(w2_ref[i], stack2,
                          preferred_element_type=jnp.float32) + b2_ref[i])
        # fused 1x1 mix conv (40->20) + residual 1x1 conv: one (CP,3*CP) dot
        h = jnp.concatenate(
            [c1.astype(jnp.bfloat16), c2.astype(jnp.bfloat16), xb], axis=0)
        x = jnp.dot(wmr_ref[i], h, preferred_element_type=jnp.float32) + bmr_ref[i]

    x = _elu(x)
    # both heads in one dot: rows 0/1 = beats/downbeats, rows 2..7 = padding
    logits = jnp.dot(hw_ref[...], x.astype(jnp.bfloat16),
                     preferred_element_type=jnp.float32) + hb_ref[...]
    out_ref[...] = _sigmoid(logits)


def tcn_heads(x, pk):
    _, L = x.shape
    vmem = pl.BlockSpec(memory_space=pltpu.MemorySpace.VMEM)
    args = (x, pk['w1s'], pk['b1s'], pk['w2s'], pk['b2s'],
            pk['wmr'], pk['bmr'], pk['hw'], pk['hb'])
    out = pl.pallas_call(
        tcn_kernel,
        out_shape=jax.ShapeDtypeStruct((8, L), jnp.float32),
        in_specs=[vmem] * len(args),
        out_specs=vmem,
        compiler_params=pltpu.CompilerParams(vmem_limit_bytes=32 * 1024 * 1024),
    )(*args)
    return out[0:1, :].T, out[1:2, :].T     # (L, 1) each, like the PyTorch module


# ------------------------------ full forward ---------------------------------
def forward(x, pk):
    # x: NCHW (1, 1, T, F)
    x3 = x[0].astype(jnp.float32)                          # (1, T, F)
    y, Ho, Wp = conv_pool_stage(pk['w1'], pk['b1'], x3, 3, 3)           # conv1 3x3
    y, Ho, Wp = conv_pool_stage(pk['w2'], pk['b2'], y.reshape(CP, Ho, Wp), 1, 10)  # conv2 1x10
    y, Ho, Wp = conv_pool_stage(pk['w3'], pk['b3'], y.reshape(CP, Ho, Wp), 3, 3)   # conv3 3x3
    # torch.reshape(x, (20, -1)): rows 0..19 of y are the 20 real channels in
    # (h, w) row-major order; rows 20..31 are zero padding carried through.
    return tcn_heads(y, pk)


# -------------------------- deterministic parameters -------------------------
def init_params(key):
    """Natural (module-shaped) random parameters."""
    keys = jax.random.split(key, 19)

    def nrm(k, shape, fan_in):
        return jax.random.normal(k, shape, dtype=jnp.float32) / np.sqrt(float(fan_in))

    p = {}
    # conv2d weights flattened as (Cout, Cin*kh*kw), row order (c, dh, dw)
    p['w1'] = nrm(keys[0], (NCH, 9), 9);        p['b1'] = nrm(keys[1], (NCH, 1), 9)
    p['w2'] = nrm(keys[2], (NCH, 200), 200);    p['b2'] = nrm(keys[3], (NCH, 1), 200)
    p['w3'] = nrm(keys[4], (NCH, 180), 180);    p['b3'] = nrm(keys[5], (NCH, 1), 180)
    # TCN blocks: dilated conv weights stored as (block, tap, Cout, Cin)
    p['res_w'] = nrm(keys[6], (NBLK, NCH, NCH), NCH);        p['res_b'] = nrm(keys[7], (NBLK, NCH, 1), NCH)
    p['d1_w'] = nrm(keys[8], (NBLK, KSIZE, NCH, NCH), 100);  p['d1_b'] = nrm(keys[9], (NBLK, NCH, 1), 100)
    p['d2_w'] = nrm(keys[10], (NBLK, KSIZE, NCH, NCH), 100); p['d2_b'] = nrm(keys[11], (NBLK, NCH, 1), 100)
    p['mix_w1'] = nrm(keys[12], (NBLK, NCH, NCH), 40)
    p['mix_w2'] = nrm(keys[13], (NBLK, NCH, NCH), 40)
    p['mix_b'] = nrm(keys[14], (NBLK, NCH, 1), 40)
    # heads: Linear(20 -> 1) + sigmoid
    p['beats_w'] = nrm(keys[15], (1, NCH), NCH);  p['beats_b'] = nrm(keys[16], (1, 1), NCH)
    p['down_w'] = nrm(keys[17], (1, NCH), NCH);   p['down_b'] = nrm(keys[18], (1, 1), NCH)
    return p


def pack_params(p):
    """Pad channels 20->CP, fuse taps/mix/residual/heads, cast matmul weights to bf16."""
    f32, bf16 = jnp.float32, jnp.bfloat16
    pk = {}

    def pad_rows(a):
        return jnp.pad(a, ((0, CP - a.shape[0]), (0, 0)))

    # ---- frontend conv weights (Cout padded, Cin padded, bf16) ----
    w1 = jnp.zeros((CP, 16), f32).at[:NCH, :9].set(p['w1'])           # Cin=1, K 9->16
    pk['w1'] = w1.astype(bf16);  pk['b1'] = pad_rows(p['b1'])
    w2 = jnp.zeros((CP, CP, 10), f32).at[:NCH, :NCH, :].set(p['w2'].reshape(NCH, NCH, 10))
    pk['w2'] = w2.reshape(CP, CP * 10).astype(bf16);  pk['b2'] = pad_rows(p['b2'])
    w3 = jnp.zeros((CP, CP, 9), f32).at[:NCH, :NCH, :].set(p['w3'].reshape(NCH, NCH, 9))
    pk['w3'] = w3.reshape(CP, CP * 9).astype(bf16);   pk['b3'] = pad_rows(p['b3'])

    # ---- TCN: stack the 5 taps into (CP, 5*CP), columns ordered (tap, cin) ----
    def pack_taps(w):                                    # (11,5,20,20) -> (11,CP,5*CP)
        t = jnp.zeros((NBLK, KSIZE, CP, CP), f32).at[:, :, :NCH, :NCH].set(w)
        t = jnp.transpose(t, (0, 2, 1, 3))               # (blk, cout, tap, cin)
        return t.reshape(NBLK, CP, KSIZE * CP).astype(bf16)

    def pad_cb(b):                                       # (11,20,1) -> (11,CP,1)
        return jnp.pad(b, ((0, 0), (0, CP - NCH), (0, 0)))

    pk['w1s'] = pack_taps(p['d1_w']);  pk['b1s'] = pad_cb(p['d1_b'])
    pk['w2s'] = pack_taps(p['d2_w']);  pk['b2s'] = pad_cb(p['d2_b'])

    # fused mix(40->20) + residual(20->20): W = [mix_w1 | mix_w2 | res_w]
    wmr = jnp.zeros((NBLK, CP, 3 * CP), f32)
    wmr = wmr.at[:, :NCH, 0 * CP:0 * CP + NCH].set(p['mix_w1'])
    wmr = wmr.at[:, :NCH, 1 * CP:1 * CP + NCH].set(p['mix_w2'])
    wmr = wmr.at[:, :NCH, 2 * CP:2 * CP + NCH].set(p['res_w'])
    pk['wmr'] = wmr.astype(bf16)
    pk['bmr'] = pad_cb(p['mix_b'] + p['res_b'])

    # fused heads (rows 0/1 real, rest padding)
    hw = jnp.zeros((8, CP), f32).at[0, :NCH].set(p['beats_w'][0]).at[1, :NCH].set(p['down_w'][0])
    hb = jnp.zeros((8, 1), f32).at[0, 0].set(p['beats_b'][0, 0]).at[1, 0].set(p['down_b'][0, 0])
    pk['hw'] = hw.astype(bf16)
    pk['hb'] = hb
    return pk


if __name__ == "__main__":
    key = jax.random.PRNGKey(0)
    kx, kp = jax.random.split(key)

    # F = 74 is the smallest spectrogram width for which the madmom frontend
    # collapses the frequency axis to 1 (as with the canonical 81-bin input).
    T, F = 20, 74
    x = jax.random.normal(kx, (1, 1, T, F), dtype=jnp.float32)   # NCHW
    params = init_params(kp)
    packed = pack_params(params)

    beats, downbeats = forward(x, packed)
    jax.block_until_ready((beats, downbeats))

    assert beats.shape == (T - 4, 1) and downbeats.shape == (T - 4, 1)
    assert bool(jnp.all(jnp.isfinite(beats))) and bool(jnp.all(jnp.isfinite(downbeats)))
    print("KERNEL_OK")
</pallas_src>

<mosaic_0001>
module attributes {stable_mosaic.version = 11 : i64} {
  func.func @conv_pool_kernel(%arg0: i32, %arg1: memref<32x16xbf16, #tpu.memory_space<vmem>>, %arg2: memref<32x1xf32, #tpu.memory_space<vmem>>, %arg3: memref<16x512xbf16, #tpu.memory_space<vmem>>, %arg4: memref<16x512xbf16, #tpu.memory_space<vmem>>, %arg5: memref<16x512xbf16, #tpu.memory_space<vmem>>, %arg6: memref<32x512xf32, #tpu.memory_space<vmem>>) attributes {dimension_semantics = [#tpu.dimension_semantics<parallel>], iteration_bounds = array<i64: 1>, scalar_prefetch = 0 : i64, scratch_operands = 0 : i64, tpu.core_type = #tpu.core_type<tc>, window_params = [{pipeline_mode = #tpu.pipeline_mode<synchronous>, transform_indices = @transform_0, window_bounds = array<i64: 32, 16>}, {pipeline_mode = #tpu.pipeline_mode<synchronous>, transform_indices = @transform_1, window_bounds = array<i64: 32, 1>}, {transform_indices = @transform_2, window_bounds = array<i64: 16, 512>}, {transform_indices = @transform_3, window_bounds = array<i64: 16, 512>}, {transform_indices = @transform_4, window_bounds = array<i64: 16, 512>}, {transform_indices = @transform_5, window_bounds = array<i64: 32, 512>}]} {
    %c0 = arith.constant 0 : index
    %c0_0 = arith.constant 0 : index
    %0 = vector.load %arg1[%c0, %c0_0] : memref<32x16xbf16, #tpu.memory_space<vmem>>, vector<32x16xbf16>
    %c0_1 = arith.constant 0 : index
    %c0_2 = arith.constant 0 : index
    %1 = vector.load %arg3[%c0_1, %c0_2] : memref<16x512xbf16, #tpu.memory_space<vmem>>, vector<16x512xbf16>
    %cst = arith.constant dense<0.000000e+00> : vector<32x512xf32>
    %2 = tpu.matmul %0, %1, %cst {dimension_numbers = #tpu.dot_dimension_numbers<[1], [0], [0], [1], [0, 0, 1, 1], [], []>} : vector<32x16xbf16>, vector<16x512xbf16>, vector<32x512xf32> -> vector<32x512xf32>
    %c0_3 = arith.constant 0 : index
    %c0_4 = arith.constant 0 : index
    %3 = vector.load %arg4[%c0_3, %c0_4] : memref<16x512xbf16, #tpu.memory_space<vmem>>, vector<16x512xbf16>
    %cst_5 = arith.constant dense<0.000000e+00> : vector<32x512xf32>
    %4 = tpu.matmul %0, %3, %cst_5 {dimension_numbers = #tpu.dot_dimension_numbers<[1], [0], [0], [1], [0, 0, 1, 1], [], []>} : vector<32x16xbf16>, vector<16x512xbf16>, vector<32x512xf32> -> vector<32x512xf32>
    %5 = arith.maximumf %2, %4 : vector<32x512xf32>
    %c0_6 = arith.constant 0 : index
    %c0_7 = arith.constant 0 : index
    %6 = vector.load %arg5[%c0_6, %c0_7] : memref<16x512xbf16, #tpu.memory_space<vmem>>, vector<16x512xbf16>
    %cst_8 = arith.constant dense<0.000000e+00> : vector<32x512xf32>
    %7 = tpu.matmul %0, %6, %cst_8 {dimension_numbers = #tpu.dot_dimension_numbers<[1], [0], [0], [1], [0, 0, 1, 1], [], []>} : vector<32x16xbf16>, vector<16x512xbf16>, vector<32x512xf32> -> vector<32x512xf32>
    %8 = arith.maximumf %5, %7 : vector<32x512xf32>
    %c0_9 = arith.constant 0 : index
    %c0_10 = arith.constant 0 : index
    %9 = vector.load %arg2[%c0_9, %c0_10] : memref<32x1xf32, #tpu.memory_space<vmem>>, vector<32x1xf32>
    %10 = vector.broadcast %9 : vector<32x1xf32> to vector<32x512xf32>
    %11 = arith.addf %8, %10 : vector<32x512xf32>
    %cst_11 = arith.constant 0.000000e+00 : f32
    %12 = vector.broadcast %cst_11 : f32 to vector<32x512xf32>
    %13 = arith.cmpf ogt, %11, %12 : vector<32x512xf32>
    %cst_12 = arith.constant 0.000000e+00 : f32
    %14 = vector.broadcast %cst_12 : f32 to vector<32x512xf32>
    %15 = arith.minimumf %11, %14 : vector<32x512xf32>
    %16 = math.exp %15 : vector<32x512xf32>
    %cst_13 = arith.constant 1.000000e+00 : f32
    %17 = vector.broadcast %cst_13 : f32 to vector<32x512xf32>
    %18 = arith.subf %16, %17 : vector<32x512xf32>
    %19 = arith.select %13, %11, %18 : vector<32x512xi1>, vector<32x512xf32>
    %c0_14 = arith.constant 0 : index
    %c0_15 = arith.constant 0 : index
    %20 = vector.load %arg6[%c0_14, %c0_15] : memref<32x512xf32, #tpu.memory_space<vmem>>, vector<32x512xf32>
    tpu.vector_store %arg6[%c0_14, %c0_15], %19 {strides = array<i32>} : memref<32x512xf32, #tpu.memory_space<vmem>>, vector<32x512xf32>,
    return
  }
  func.func @transform_0(%arg0: i32) -> (i32, i32) {
    %c0_i32 = arith.constant 0 : i32
    %c0_i32_0 = arith.constant 0 : i32
    %c0_i32_1 = arith.constant 0 : i32
    return %c0_i32, %c0_i32_0 : i32, i32
  }
  func.func @transform_1(%arg0: i32) -> (i32, i32) {
    %c0_i32 = arith.constant 0 : i32
    %c0_i32_0 = arith.constant 0 : i32
    %c0_i32_1 = arith.constant 0 : i32
    return %c0_i32, %c0_i32_0 : i32, i32
  }
  func.func @transform_2(%arg0: i32) -> (i32, i32) {
    %c0_i32 = arith.constant 0 : i32
    %c0_i32_0 = arith.constant 0 : i32
    return %c0_i32, %arg0 : i32, i32
  }
  func.func @transform_3(%arg0: i32) -> (i32, i32) {
    %c0_i32 = arith.constant 0 : i32
    %c0_i32_0 = arith.constant 0 : i32
    return %c0_i32, %arg0 : i32, i32
  }
  func.func @transform_4(%arg0: i32) -> (i32, i32) {
    %c0_i32 = arith.constant 0 : i32
    %c0_i32_0 = arith.constant 0 : i32
    return %c0_i32, %arg0 : i32, i32
  }
  func.func @transform_5(%arg0: i32) -> (i32, i32) {
    %c0_i32 = arith.constant 0 : i32
    %c0_i32_0 = arith.constant 0 : i32
    return %c0_i32, %arg0 : i32, i32
  }
}

</mosaic_0001>

<llo_original>
// kernel: tpu_custom_call.1
$region0: #{tpu_custom_call.1}
  #allocation0 [shape = 'u32[]', space=smem, size = 0x4, offset = 0x4, fixed_abs, tag = 'smem constant byte address 0x4 - core index']
  #allocation1 [shape = 'u32[144,128]{1,0:T(1,128)}', space=vmem, size = 0x12000, scoped, tag = 'internal scratch']
  %s0 = inlined_call_operand.vmem [shape: bf16[32,16], index: 0, kind: input, shape index: {}]
  %s1 = inlined_call_operand.vmem [shape: f32[32,1], index: 1, kind: input, shape index: {}]
  %s2 = inlined_call_operand.vmem [shape: bf16[16,512], index: 2, kind: input, shape index: {}]
  %s3 = inlined_call_operand.vmem [shape: bf16[16,512], index: 3, kind: input, shape index: {}]
  %s4 = inlined_call_operand.hbm [shape: bf16[16,512], index: 4, kind: input, shape index: {}]
  %s5 = inlined_call_operand.hbm [shape: f32[32,512], index: 5, kind: output, shape index: {}]
  %s6 = sld [smem:[#allocation0]]
  $region34: #{tpu_custom_call.1} parent=0
    _
  %s8 = ssub.s32 1, %s6
  %s9 = scalar_select 0, %s8, %s6
  $region1: #{tpu_custom_call.1} parent=0
    #allocation2 [shape = 'u8[16384]{0}', space=vmem, size = 0x4000, scoped, tag = 'input window, operand 4, single buffered']
    #allocation3 [shape = 's32[1]{0}', space=sflag, size = 0x4, scoped, tag = 'scoped memory for tpu_custom_call.1']
    #allocation4 [shape = 's32[1]{0}', space=sflag, size = 0x4, scoped, tag = 'scoped memory for tpu_custom_call.1']
    #allocation5 [shape = 'u8[65536]{0}', space=vmem, size = 0x10000, scoped, tag = 'output window, operand 0, single buffered']
    %10 = vsyncpa [#allocation3], 0
    %11 = vsyncpa [#allocation4], 0
    // Predicated region
    $region2: #{tpu_custom_call.1} parent=1 // pred_check
      _
    $region3: #{tpu_custom_call.1} parent=1 // pred_check_branch
      %13 = sbr.rel (0) target = $region5
    $region4: #{tpu_custom_call.1} parent=1 // pred_region
      _
    $region5: #{tpu_custom_call.1} parent=1 // pred_fallthru
      _
    // Predicated region
    $region6: #{tpu_custom_call.1} parent=1 // pred_check
      _
    $region7: #{tpu_custom_call.1} parent=1 // pred_check_branch
      %15 = sbr.rel (0) target = $region9
    $region8: #{tpu_custom_call.1} parent=1 // pred_region
      _
    $region9: #{tpu_custom_call.1} parent=1 // pred_fallthru
      _
    // Predicated region
    $region10: #{tpu_custom_call.1} parent=1 // pred_check
      _
    $region11: #{tpu_custom_call.1} parent=1 // pred_check_branch
      %17 = sbr.rel (0) target = $region13
    $region12: #{tpu_custom_call.1} parent=1 // pred_region
      _
    $region13: #{tpu_custom_call.1} parent=1 // pred_fallthru
      _
    // Predicated region
    $region14: #{tpu_custom_call.1} parent=1 // pred_check
      _
    $region15: #{tpu_custom_call.1} parent=1 // pred_check_branch
      %19 = sbr.rel (0) target = $region17
    $region16: #{tpu_custom_call.1} parent=1 // pred_region
      _
    $region17: #{tpu_custom_call.1} parent=1 // pred_fallthru
      _
    // Predicated region
    $region18: #{tpu_custom_call.1} parent=1 // pred_check
      _
    $region19: #{tpu_custom_call.1} parent=1 // pred_check_branch
      %21 = sbr.rel (0) target = $region21
    $region20: #{tpu_custom_call.1} parent=1 // pred_region
      %s23 = ssub.s32 512, 512
      %24 = vsyncadd [#allocation3], %s23
      %s25 = sshll.u32 [#allocation2], 4
      %s26 = int_to_ptr.vmem [resolvable:$true] %s25
      %31 = dma.hbm_to_vmem [thread:$0]  %s4, 512, %s26, [#allocation3], 256, 256, 16
    $region21: #{tpu_custom_call.1} parent=1 // pred_fallthru
      _
    // Predicated region
    $region22: #{tpu_custom_call.1} parent=1 // pred_check
      _
    $region23: #{tpu_custom_call.1} parent=1 // pred_check_branch
      %33 = sbr.rel (0) target = $region25
    $region24: #{tpu_custom_call.1} parent=1 // pred_region
      %34 = dma.done [#allocation3], 512
    $region25: #{tpu_custom_call.1} parent=1 // pred_fallthru
      _
    %v36 = vld [vmem:[%s0] sm:$0xf]
    %v37 = vld [vmem:[%s0 + $0x4] sm:$0xf]
    %v38 = vld [vmem:[%s0 + $0x8] sm:$0xf]
    %v39 = vld [vmem:[%s0 + $0xc] sm:$0xf]
    %v40 = vld [vmem:[%s2] sm:$0xff]
    %v41 = vld [vmem:[%s2 + $0x8] sm:$0xff]
    %v42 = vld [vmem:[%s2 + $0x10] sm:$0xff]
    %v43 = vld [vmem:[%s2 + $0x18] sm:$0xff]
    %v48 = vunpack.c.l.b16 %v36
    %v49 = vunpack.c.l.b16 %v37
    %v50 = vunpack.c.l.b16 %v38
    %v51 = vunpack.c.l.b16 %v39
    %v52 = vpack.c.b16 %v49, %v48
    %v53 = vpack.c.b16 %v51, %v50
    %v58 = vunpack.c.l.b16 %v40
    %v59 = vunpack.c.h.b16 %v40
    %v60 = vunpack.c.l.b16 %v41
    %v61 = vunpack.c.h.b16 %v41
    %v62 = vunpack.c.l.b16 %v42
    %v63 = vunpack.c.h.b16 %v42
    %v64 = vunpack.c.l.b16 %v43
    %v65 = vunpack.c.h.b16 %v43
    %v66 = vpack.c.b16 %v62, %v58
    %v67 = vpack.c.b16 %v63, %v59
    %v68 = vpack.c.b16 %v64, %v60
    %v69 = vpack.c.b16 %v65, %v61
    %vm74 = vcmask 130048
    %v76 = vsel %vm74, %v52, 0
    %v79 = vsel %vm74, %v53, 0
    %81 = vmatprep.subr.bf16.mxu0 %v67
    %82 = vmatpush1.bf16.msra.mxu0 %v66
    %83 = vmatprep.subr.bf16.mxu0 0
    %84 = vmatpush1.bf16.msra.mxu0 0
    %85 = vmatprep.subr.bf16.mxu0 0
    %86 = vmatpush1.bf16.msra.mxu0 0
    %87 = vmatprep.subr.bf16.mxu0 0
    %88 = vmatpush1.bf16.msra.mxu0 0
    %89 = vmatprep.subr.bf16.mxu0 0
    %90 = vmatpush1.bf16.msra.mxu0 0
    %91 = vmatprep.subr.bf16.mxu0 0
    %92 = vmatpush1.bf16.msra.mxu0 0
    %93 = vmatprep.subr.bf16.mxu0 0
    %94 = vmatpush1.bf16.msra.mxu0 0
    %95 = vmatprep.subr.bf16.mxu0 0
    %96 = vmatpush1.bf16.msra.mxu0 0
    %97 = vmatprep.subr.bf16.mxu0 0
    %98 = vmatpush1.bf16.msra.mxu0 0
    %99 = vmatprep.subr.bf16.mxu0 0
    %100 = vmatpush1.bf16.msra.mxu0 0
    %101 = vmatprep.subr.bf16.mxu0 0
    %102 = vmatpush1.bf16.msra.mxu0 0
    %103 = vmatprep.subr.bf16.mxu0 0
    %104 = vmatpush1.bf16.msra.mxu0 0
    %105 = vmatprep.subr.bf16.mxu0 0
    %106 = vmatpush1.bf16.msra.mxu0 0
    %107 = vmatprep.subr.bf16.mxu0 0
    %108 = vmatpush1.bf16.msra.mxu0 0
    %109 = vmatprep.subr.bf16.mxu0 0
    %110 = vmatpush1.bf16.msra.mxu0 0
    %111 = vmatprep.subr.bf16.mxu0 0
    %112 = vmatpush1.bf16.msra.mxu0 0
    %113 = vmatprep.mubr.bf16.mxu0 0
    %114 = vmatmul.mubr.bf16.gmra.mrb[0].mxu0 %v76
    %v115 = vpop.f32.mrb[0].mxu0
    %v116 = vadd.f32 0.0, %v115
    %v117 = vpop.f32.mrb[0].mxu0
    %v118 = vadd.f32 0.0, %v117
    %v119 = vpop.f32.mrb[0].mxu0
    %v120 = vadd.f32 0.0, %v119
    %v121 = vpop.f32.mrb[0].mxu0
    %v122 = vadd.f32 0.0, %v121
    %123 = vmatprep.mubr.bf16.mxu0 0
    %124 = vmatmul.mubr.bf16.gmra.mrb[0].mxu0 %v79
    %v125 = vpop.f32.mrb[0].mxu0
    %v126 = vadd.f32 0.0, %v125
    %v127 = vpop.f32.mrb[0].mxu0
    %v128 = vadd.f32 0.0, %v127
    %v129 = vpop.f32.mrb[0].mxu0
    %v130 = vadd.f32 0.0, %v129
    %v131 = vpop.f32.mrb[0].mxu0
    %v132 = vadd.f32 0.0, %v131
    %133 = vdwg.mxu0
    %134 = vmatprep.subr.bf16.mxu0 %v69
    %135 = vmatpush1.bf16.msra.mxu0 %v68
    %136 = vmatprep.subr.bf16.mxu0 0
    %137 = vmatpush1.bf16.msra.mxu0 0
    %138 = vmatprep.subr.bf16.mxu0 0
    %139 = vmatpush1.bf16.msra.mxu0 0
    %140 = vmatprep.subr.bf16.mxu0 0
    %141 = vmatpush1.bf16.msra.mxu0 0
    %142 = vmatprep.subr.bf16.mxu0 0
    %143 = vmatpush1.bf16.msra.mxu0 0
    %144 = vmatprep.subr.bf16.mxu0 0
    %145 = vmatpush1.bf16.msra.mxu0 0
    %146 = vmatprep.subr.bf16.mxu0 0
    %147 = vmatpush1.bf16.msra.mxu0 0
    %148 = vmatprep.subr.bf16.mxu0 0
    %149 = vmatpush1.bf16.msra.mxu0 0
    %150 = vmatprep.subr.bf16.mxu0 0
    %151 = vmatpush1.bf16.msra.mxu0 0
    %152 = vmatprep.subr.bf16.mxu0 0
    %153 = vmatpush1.bf16.msra.mxu0 0
    %154 = vmatprep.subr.bf16.mxu0 0
    %155 = vmatpush1.bf16.msra.mxu0 0
    %156 = vmatprep.subr.bf16.mxu0 0
    %157 = vmatpush1.bf16.msra.mxu0 0
    %158 = vmatprep.subr.bf16.mxu0 0
    %159 = vmatpush1.bf16.msra.mxu0 0
    %160 = vmatprep.subr.bf16.mxu0 0
    %161 = vmatpush1.bf16.msra.mxu0 0
    %162 = vmatprep.subr.bf16.mxu0 0
    %163 = vmatpush1.bf16.msra.mxu0 0
    %164 = vmatprep.subr.bf16.mxu0 0
    %165 = vmatpush1.bf16.msra.mxu0 0
    %166 = vmatprep.mubr.bf16.mxu0 0
    %167 = vmatmul.mubr.bf16.gmra.mrb[0].mxu0 %v76
    %v168 = vpop.f32.mrb[0].mxu0
    %v169 = vadd.f32 0.0, %v168
    %v170 = vpop.f32.mrb[0].mxu0
    %v171 = vadd.f32 0.0, %v170
    %v172 = vpop.f32.mrb[0].mxu0
    %v173 = vadd.f32 0.0, %v172
    %v174 = vpop.f32.mrb[0].mxu0
    %v175 = vadd.f32 0.0, %v174
    %176 = vmatprep.mubr.bf16.mxu0 0
    %177 = vmatmul.mubr.bf16.gmra.mrb[0].mxu0 %v79
    %v178 = vpop.f32.mrb[0].mxu0
    %v179 = vadd.f32 0.0, %v178
    %v180 = vpop.f32.mrb[0].mxu0
    %v181 = vadd.f32 0.0, %v180
    %v182 = vpop.f32.mrb[0].mxu0
    %v183 = vadd.f32 0.0, %v182
    %v184 = vpop.f32.mrb[0].mxu0
    %v185 = vadd.f32 0.0, %v184
    %186 = vdwg.mxu0
    %v187 = vld [vmem:[%s3] sm:$0xff]
    %v188 = vld [vmem:[%s3 + $0x8] sm:$0xff]
    %v189 = vld [vmem:[%s3 + $0x10] sm:$0xff]
    %v190 = vld [vmem:[%s3 + $0x18] sm:$0xff]
    %v195 = vunpack.c.l.b16 %v187
    %v196 = vunpack.c.h.b16 %v187
    %v197 = vunpack.c.l.b16 %v188
    %v198 = vunpack.c.h.b16 %v188
    %v199 = vunpack.c.l.b16 %v189
    %v200 = vunpack.c.h.b16 %v189
    %v201 = vunpack.c.l.b16 %v190
    %v202 = vunpack.c.h.b16 %v190
    %v203 = vpack.c.b16 %v199, %v195
    %v204 = vpack.c.b16 %v200, %v196
    %v205 = vpack.c.b16 %v201, %v197
    %v206 = vpack.c.b16 %v202, %v198
    %211 = vmatprep.subr.bf16.mxu0 %v204
    %212 = vmatpush1.bf16.msra.mxu0 %v203
    %213 = vmatprep.subr.bf16.mxu0 0
    %214 = vmatpush1.bf16.msra.mxu0 0
    %215 = vmatprep.subr.bf16.mxu0 0
    %216 = vmatpush1.bf16.msra.mxu0 0
    %217 = vmatprep.subr.bf16.mxu0 0
    %218 = vmatpush1.bf16.msra.mxu0 0
    %219 = vmatprep.subr.bf16.mxu0 0
    %220 = vmatpush1.bf16.msra.mxu0 0
    %221 = vmatprep.subr.bf16.mxu0 0
    %222 = vmatpush1.bf16.msra.mxu0 0
    %223 = vmatprep.subr.bf16.mxu0 0
    %224 = vmatpush1.bf16.msra.mxu0 0
    %225 = vmatprep.subr.bf16.mxu0 0
    %226 = vmatpush1.bf16.msra.mxu0 0
    %227 = vmatprep.subr.bf16.mxu0 0
    %228 = vmatpush1.bf16.msra.mxu0 0
    %229 = vmatprep.subr.bf16.mxu0 0
    %230 = vmatpush1.bf16.msra.mxu0 0
    %231 = vmatprep.subr.bf16.mxu0 0
    %232 = vmatpush1.bf16.msra.mxu0 0
    %233 = vmatprep.subr.bf16.mxu0 0
    %234 = vmatpush1.bf16.msra.mxu0 0
    %235 = vmatprep.subr.bf16.mxu0 0
    %236 = vmatpush1.bf16.msra.mxu0 0
    %237 = vmatprep.subr.bf16.mxu0 0
    %238 = vmatpush1.bf16.msra.mxu0 0
    %239 = vmatprep.subr.bf16.mxu0 0
    %240 = vmatpush1.bf16.msra.mxu0 0
    %241 = vmatprep.subr.bf16.mxu0 0
    %242 = vmatpush1.bf16.msra.mxu0 0
    %243 = vmatprep.mubr.bf16.mxu0 0
    %244 = vmatmul.mubr.bf16.gmra.mrb[0].mxu0 %v76
    %v245 = vpop.f32.mrb[0].mxu0
    %v246 = vadd.f32 0.0, %v245
    %v247 = vpop.f32.mrb[0].mxu0
    %v248 = vadd.f32 0.0, %v247
    %v249 = vpop.f32.mrb[0].mxu0
    %v250 = vadd.f32 0.0, %v249
    %v251 = vpop.f32.mrb[0].mxu0
    %v252 = vadd.f32 0.0, %v251
    %253 = vmatprep.mubr.bf16.mxu0 0
    %254 = vmatmul.mubr.bf16.gmra.mrb[0].mxu0 %v79
    %v255 = vpop.f32.mrb[0].mxu0
    %v256 = vadd.f32 0.0, %v255
    %v257 = vpop.f32.mrb[0].mxu0
    %v258 = vadd.f32 0.0, %v257
    %v259 = vpop.f32.mrb[0].mxu0
    %v260 = vadd.f32 0.0, %v259
    %v261 = vpop.f32.mrb[0].mxu0
    %v262 = vadd.f32 0.0, %v261
    %263 = vdwg.mxu0
    %264 = vmatprep.subr.bf16.mxu0 %v206
    %265 = vmatpush1.bf16.msra.mxu0 %v205
    %266 = vmatprep.subr.bf16.mxu0 0
    %267 = vmatpush1.bf16.msra.mxu0 0
    %268 = vmatprep.subr.bf16.mxu0 0
    %269 = vmatpush1.bf16.msra.mxu0 0
    %270 = vmatprep.subr.bf16.mxu0 0
    %271 = vmatpush1.bf16.msra.mxu0 0
    %272 = vmatprep.subr.bf16.mxu0 0
    %273 = vmatpush1.bf16.msra.mxu0 0
    %274 = vmatprep.subr.bf16.mxu0 0
    %275 = vmatpush1.bf16.msra.mxu0 0
    %276 = vmatprep.subr.bf16.mxu0 0
    %277 = vmatpush1.bf16.msra.mxu0 0
    %278 = vmatprep.subr.bf16.mxu0 0
    %279 = vmatpush1.bf16.msra.mxu0 0
    %280 = vmatprep.subr.bf16.mxu0 0
    %281 = vmatpush1.bf16.msra.mxu0 0
    %282 = vmatprep.subr.bf16.mxu0 0
    %283 = vmatpush1.bf16.msra.mxu0 0
    %284 = vmatprep.subr.bf16.mxu0 0
    %285 = vmatpush1.bf16.msra.mxu0 0
    %286 = vmatprep.subr.bf16.mxu0 0
    %287 = vmatpush1.bf16.msra.mxu0 0
    %288 = vmatprep.subr.bf16.mxu0 0
    %289 = vmatpush1.bf16.msra.mxu0 0
    %290 = vmatprep.subr.bf16.mxu0 0
    %291 = vmatpush1.bf16.msra.mxu0 0
    %292 = vmatprep.subr.bf16.mxu0 0
    %293 = vmatpush1.bf16.msra.mxu0 0
    %294 = vmatprep.subr.bf16.mxu0 0
    %295 = vmatpush1.bf16.msra.mxu0 0
    %296 = vmatprep.mubr.bf16.mxu0 0
    %297 = vmatmul.mubr.bf16.gmra.mrb[0].mxu0 %v76
    %v298 = vpop.f32.mrb[0].mxu0
    %v299 = vadd.f32 0.0, %v298
    %v300 = vpop.f32.mrb[0].mxu0
    %v301 = vadd.f32 0.0, %v300
    %v302 = vpop.f32.mrb[0].mxu0
    %v303 = vadd.f32 0.0, %v302
    %v304 = vpop.f32.mrb[0].mxu0
    %v305 = vadd.f32 0.0, %v304
    %306 = vmatprep.mubr.bf16.mxu0 0
    %307 = vmatmul.mubr.bf16.gmra.mrb[0].mxu0 %v79
    %v308 = vpop.f32.mrb[0].mxu0
    %v309 = vadd.f32 0.0, %v308
    %v310 = vpop.f32.mrb[0].mxu0
    %v311 = vadd.f32 0.0, %v310
    %v312 = vpop.f32.mrb[0].mxu0
    %v313 = vadd.f32 0.0, %v312
    %v314 = vpop.f32.mrb[0].mxu0
    %v315 = vadd.f32 0.0, %v314
    %316 = vdwg.mxu0
    %v317 = vmax.f32 %v116, %v246
    %v318 = vmax.f32 %v118, %v248
    %v319 = vmax.f32 %v169, %v299
    %v320 = vmax.f32 %v171, %v301
    %v321 = vmax.f32 %v120, %v250
    %v322 = vmax.f32 %v122, %v252
    %v323 = vmax.f32 %v173, %v303
    %v324 = vmax.f32 %v175, %v305
    %v325 = vmax.f32 %v126, %v256
    %v326 = vmax.f32 %v128, %v258
    %v327 = vmax.f32 %v179, %v309
    %v328 = vmax.f32 %v181, %v311
    %v329 = vmax.f32 %v130, %v260
    %v330 = vmax.f32 %v132, %v262
    %v331 = vmax.f32 %v183, %v313
    %v332 = vmax.f32 %v185, %v315
    %v333 = vld [vmem:[#allocation2] sm:$0xff]
    %v334 = vld [vmem:[#allocation2 + $0x8] sm:$0xff]
    %v335 = vld [vmem:[#allocation2 + $0x10] sm:$0xff]
    %v336 = vld [vmem:[#allocation2 + $0x18] sm:$0xff]
    %v341 = vunpack.c.l.b16 %v333
    %v342 = vunpack.c.h.b16 %v333
    %v343 = vunpack.c.l.b16 %v334
    %v344 = vunpack.c.h.b16 %v334
    %v345 = vunpack.c.l.b16 %v335
    %v346 = vunpack.c.h.b16 %v335
    %v347 = vunpack.c.l.b16 %v336
    %v348 = vunpack.c.h.b16 %v336
    %v349 = vpack.c.b16 %v345, %v341
    %v350 = vpack.c.b16 %v346, %v342
    %v351 = vpack.c.b16 %v347, %v343
    %v352 = vpack.c.b16 %v348, %v344
    %357 = vmatprep.subr.bf16.mxu0 %v350
    %358 = vmatpush1.bf16.msra.mxu0 %v349
    %359 = vmatprep.subr.bf16.mxu0 0
    %360 = vmatpush1.bf16.msra.mxu0 0
    %361 = vmatprep.subr.bf16.mxu0 0
    %362 = vmatpush1.bf16.msra.mxu0 0
    %363 = vmatprep.subr.bf16.mxu0 0
    %364 = vmatpush1.bf16.msra.mxu0 0
    %365 = vmatprep.subr.bf16.mxu0 0
    %366 = vmatpush1.bf16.msra.mxu0 0
    %367 = vmatprep.subr.bf16.mxu0 0
    %368 = vmatpush1.bf16.msra.mxu0 0
    %369 = vmatprep.subr.bf16.mxu0 0
    %370 = vmatpush1.bf16.msra.mxu0 0
    %371 = vmatprep.subr.bf16.mxu0 0
    %372 = vmatpush1.bf16.msra.mxu0 0
    %373 = vmatprep.subr.bf16.mxu0 0
    %374 = vmatpush1.bf16.msra.mxu0 0
    %375 = vmatprep.subr.bf16.mxu0 0
    %376 = vmatpush1.bf16.msra.mxu0 0
    %377 = vmatprep.subr.bf16.mxu0 0
    %378 = vmatpush1.bf16.msra.mxu0 0
    %379 = vmatprep.subr.bf16.mxu0 0
    %380 = vmatpush1.bf16.msra.mxu0 0
    %381 = vmatprep.subr.bf16.mxu0 0
    %382 = vmatpush1.bf16.msra.mxu0 0
    %383 = vmatprep.subr.bf16.mxu0 0
    %384 = vmatpush1.bf16.msra.mxu0 0
    %385 = vmatprep.subr.bf16.mxu0 0
    %386 = vmatpush1.bf16.msra.mxu0 0
    %387 = vmatprep.subr.bf16.mxu0 0
    %388 = vmatpush1.bf16.msra.mxu0 0
    %389 = vmatprep.mubr.bf16.mxu0 0
    %390 = vmatmul.mubr.bf16.gmra.mrb[0].mxu0 %v76
    %v391 = vpop.f32.mrb[0].mxu0
    %v392 = vadd.f32 0.0, %v391
    %v393 = vpop.f32.mrb[0].mxu0
    %v394 = vadd.f32 0.0, %v393
    %v395 = vpop.f32.mrb[0].mxu0
    %v396 = vadd.f32 0.0, %v395
    %v397 = vpop.f32.mrb[0].mxu0
    %v398 = vadd.f32 0.0, %v397
    %399 = vmatprep.mubr.bf16.mxu0 0
    %400 = vmatmul.mubr.bf16.gmra.mrb[0].mxu0 %v79
    %v401 = vpop.f32.mrb[0].mxu0
    %v402 = vadd.f32 0.0, %v401
    %v403 = vpop.f32.mrb[0].mxu0
    %v404 = vadd.f32 0.0, %v403
    %v405 = vpop.f32.mrb[0].mxu0
    %v406 = vadd.f32 0.0, %v405
    %v407 = vpop.f32.mrb[0].mxu0
    %v408 = vadd.f32 0.0, %v407
    %409 = vdwg.mxu0
    %410 = vmatprep.subr.bf16.mxu0 %v352
    %411 = vmatpush1.bf16.msra.mxu0 %v351
    %412 = vmatprep.subr.bf16.mxu0 0
    %413 = vmatpush1.bf16.msra.mxu0 0
    %414 = vmatprep.subr.bf16.mxu0 0
    %415 = vmatpush1.bf16.msra.mxu0 0
    %416 = vmatprep.subr.bf16.mxu0 0
    %417 = vmatpush1.bf16.msra.mxu0 0
    %418 = vmatprep.subr.bf16.mxu0 0
    %419 = vmatpush1.bf16.msra.mxu0 0
    %420 = vmatprep.subr.bf16.mxu0 0
    %421 = vmatpush1.bf16.msra.mxu0 0
    %422 = vmatprep.subr.bf16.mxu0 0
    %423 = vmatpush1.bf16.msra.mxu0 0
    %424 = vmatprep.subr.bf16.mxu0 0
    %425 = vmatpush1.bf16.msra.mxu0 0
    %426 = vmatprep.subr.bf16.mxu0 0
    %427 = vmatpush1.bf16.msra.mxu0 0
    %428 = vmatprep.subr.bf16.mxu0 0
    %429 = vmatpush1.bf16.msra.mxu0 0
    %430 = vmatprep.subr.bf16.mxu0 0
    %431 = vmatpush1.bf16.msra.mxu0 0
    %432 = vmatprep.subr.bf16.mxu0 0
    %433 = vmatpush1.bf16.msra.mxu0 0
    %434 = vmatprep.subr.bf16.mxu0 0
    %435 = vmatpush1.bf16.msra.mxu0 0
    %436 = vmatprep.subr.bf16.mxu0 0
    %437 = vmatpush1.bf16.msra.mxu0 0
    %438 = vmatprep.subr.bf16.mxu0 0
    %439 = vmatpush1.bf16.msra.mxu0 0
    %440 = vmatprep.subr.bf16.mxu0 0
    %441 = vmatpush1.bf16.msra.mxu0 0
    %442 = vmatprep.mubr.bf16.mxu0 0
    %443 = vmatmul.mubr.bf16.gmra.mrb[0].mxu0 %v76
    %v444 = vpop.f32.mrb[0].mxu0
    %v445 = vadd.f32 0.0, %v444
    %v446 = vpop.f32.mrb[0].mxu0
    %v447 = vadd.f32 0.0, %v446
    %v448 = vpop.f32.mrb[0].mxu0
    %v449 = vadd.f32 0.0, %v448
    %v450 = vpop.f32.mrb[0].mxu0
    %v451 = vadd.f32 0.0, %v450
    %452 = vmatprep.mubr.bf16.mxu0 0
    %453 = vmatmul.mubr.bf16.gmra.mrb[0].mxu0 %v79
    %v454 = vpop.f32.mrb[0].mxu0
    %v455 = vadd.f32 0.0, %v454
    %v456 = vpop.f32.mrb[0].mxu0
    %v457 = vadd.f32 0.0, %v456
    %v458 = vpop.f32.mrb[0].mxu0
    %v459 = vadd.f32 0.0, %v458
    %v460 = vpop.f32.mrb[0].mxu0
    %v461 = vadd.f32 0.0, %v460
    %462 = vdwg.mxu0
    %v463 = vmax.f32 %v317, %v392
    %v464 = vmax.f32 %v318, %v394
    %v465 = vmax.f32 %v319, %v445
    %v466 = vmax.f32 %v320, %v447
    %v467 = vmax.f32 %v321, %v396
    %v468 = vmax.f32 %v322, %v398
    %v469 = vmax.f32 %v323, %v449
    %v470 = vmax.f32 %v324, %v451
    %v471 = vmax.f32 %v325, %v402
    %v472 = vmax.f32 %v326, %v404
    %v473 = vmax.f32 %v327, %v455
    %v474 = vmax.f32 %v328, %v457
    %v475 = vmax.f32 %v329, %v406
    %v476 = vmax.f32 %v330, %v408
    %v477 = vmax.f32 %v331, %v459
    %v478 = vmax.f32 %v332, %v461
    %v479 = vld [vmem:[%s1] sm:$0xff]
    %v480 = vld [vmem:[%s1 + $0x8] sm:$0xff]
    %v481 = vld [vmem:[%s1 + $0x10] sm:$0xff]
    %v482 = vld [vmem:[%s1 + $0x18] sm:$0xff]
    %484 = vset.pattern.permute.xlu0 0
    %485 = vperm.xlu0 %484, %v479
    %v486 = vpop.permute.xlu0 %485
    %489 = vset.pattern.permute.xlu0 0
    %490 = vperm.xlu0 %489, %v480
    %v491 = vpop.permute.xlu0 %490
    %494 = vset.pattern.permute.xlu0 0
    %495 = vperm.xlu0 %494, %v481
    %v496 = vpop.permute.xlu0 %495
    %499 = vset.pattern.permute.xlu0 0
    %500 = vperm.xlu0 %499, %v482
    %v501 = vpop.permute.xlu0 %500
    %v503 = vadd.f32 %v463, %v486
    %v504 = vadd.f32 %v464, %v486
    %v505 = vadd.f32 %v465, %v486
    %v506 = vadd.f32 %v466, %v486
    %v507 = vadd.f32 %v467, %v491
    %v508 = vadd.f32 %v468, %v491
    %v509 = vadd.f32 %v469, %v491
    %v510 = vadd.f32 %v470, %v491
    %v511 = vadd.f32 %v471, %v496
    %v512 = vadd.f32 %v472, %v496
    %v513 = vadd.f32 %v473, %v496
    %v514 = vadd.f32 %v474, %v496
    %v515 = vadd.f32 %v475, %v501
    %v516 = vadd.f32 %v476, %v501
    %v517 = vadd.f32 %v477, %v501
    %v518 = vadd.f32 %v478, %v501
    %vm519 = vcmp.gt.f32.partialorder %v503, 0.0
    %vm520 = vcmp.gt.f32.partialorder %v504, 0.0
    %vm521 = vcmp.gt.f32.partialorder %v505, 0.0
    %vm522 = vcmp.gt.f32.partialorder %v506, 0.0
    %vm523 = vcmp.gt.f32.partialorder %v507, 0.0
    %vm524 = vcmp.gt.f32.partialorder %v508, 0.0
    %vm525 = vcmp.gt.f32.partialorder %v509, 0.0
    %vm526 = vcmp.gt.f32.partialorder %v510, 0.0
    %vm527 = vcmp.gt.f32.partialorder %v511, 0.0
    %vm528 = vcmp.gt.f32.partialorder %v512, 0.0
    %vm529 = vcmp.gt.f32.partialorder %v513, 0.0
    %vm530 = vcmp.gt.f32.partialorder %v514, 0.0
    %vm531 = vcmp.gt.f32.partialorder %v515, 0.0
    %vm532 = vcmp.gt.f32.partialorder %v516, 0.0
    %vm533 = vcmp.gt.f32.partialorder %v517, 0.0
    %vm534 = vcmp.gt.f32.partialorder %v518, 0.0
    %v535 = vmin.f32 %v503, 0.0
    %v536 = vmin.f32 %v504, 0.0
    %v537 = vmin.f32 %v505, 0.0
    %v538 = vmin.f32 %v506, 0.0
    %v539 = vmin.f32 %v507, 0.0
    %v540 = vmin.f32 %v508, 0.0
    %v541 = vmin.f32 %v509, 0.0
    %v542 = vmin.f32 %v510, 0.0
    %v543 = vmin.f32 %v511, 0.0
    %v544 = vmin.f32 %v512, 0.0
    %v545 = vmin.f32 %v513, 0.0
    %v546 = vmin.f32 %v514, 0.0
    %v547 = vmin.f32 %v515, 0.0
    %v548 = vmin.f32 %v516, 0.0
    %v549 = vmin.f32 %v517, 0.0
    %v550 = vmin.f32 %v518, 0.0
    %v551 = vmul.f32 %v535, 1.442695
    %v552 = vpow.pop %v551
    %v553 = vmul.f32 %v536, 1.442695
    %v554 = vpow.pop %v553
    %v555 = vmul.f32 %v537, 1.442695
    %v556 = vpow.pop %v555
    %v557 = vmul.f32 %v538, 1.442695
    %v558 = vpow.pop %v557
    %v559 = vmul.f32 %v539, 1.442695
    %v560 = vpow.pop %v559
    %v561 = vmul.f32 %v540, 1.442695
    %v562 = vpow.pop %v561
    %v563 = vmul.f32 %v541, 1.442695
    %v564 = vpow.pop %v563
    %v565 = vmul.f32 %v542, 1.442695
    %v566 = vpow.pop %v565
    %v567 = vmul.f32 %v543, 1.442695
    %v568 = vpow.pop %v567
    %v569 = vmul.f32 %v544, 1.442695
    %v570 = vpow.pop %v569
    %v571 = vmul.f32 %v545, 1.442695
    %v572 = vpow.pop %v571
    %v573 = vmul.f32 %v546, 1.442695
    %v574 = vpow.pop %v573
    %v575 = vmul.f32 %v547, 1.442695
    %v576 = vpow.pop %v575
    %v577 = vmul.f32 %v548, 1.442695
    %v578 = vpow.pop %v577
    %v579 = vmul.f32 %v549, 1.442695
    %v580 = vpow.pop %v579
    %v581 = vmul.f32 %v550, 1.442695
    %v582 = vpow.pop %v581
    %v583 = vsub.f32 %v552, 1.0
    %v584 = vsub.f32 %v554, 1.0
    %v585 = vsub.f32 %v556, 1.0
    %v586 = vsub.f32 %v558, 1.0
    %v587 = vsub.f32 %v560, 1.0
    %v588 = vsub.f32 %v562, 1.0
    %v589 = vsub.f32 %v564, 1.0
    %v590 = vsub.f32 %v566, 1.0
    %v591 = vsub.f32 %v568, 1.0
    %v592 = vsub.f32 %v570, 1.0
    %v593 = vsub.f32 %v572, 1.0
    %v594 = vsub.f32 %v574, 1.0
    %v595 = vsub.f32 %v576, 1.0
    %v596 = vsub.f32 %v578, 1.0
    %v597 = vsub.f32 %v580, 1.0
    %v598 = vsub.f32 %v582, 1.0
    %v599 = vsel %vm519, %v503, %v583
    %v600 = vsel %vm520, %v504, %v584
    %v601 = vsel %vm521, %v505, %v585
    %v602 = vsel %vm522, %v506, %v586
    %v603 = vsel %vm523, %v507, %v587
    %v604 = vsel %vm524, %v508, %v588
    %v605 = vsel %vm525, %v509, %v589
    %v606 = vsel %vm526, %v510, %v590
    %v607 = vsel %vm527, %v511, %v591
    %v608 = vsel %vm528, %v512, %v592
    %v609 = vsel %vm529, %v513, %v593
    %v610 = vsel %vm530, %v514, %v594
    %v611 = vsel %vm531, %v515, %v595
    %v612 = vsel %vm532, %v516, %v596
    %v613 = vsel %vm533, %v517, %v597
    %v614 = vsel %vm534, %v518, %v598
    %615 = vst [vmem:[#allocation5] sm:$0xff] %v599
    %616 = vst [vmem:[#allocation5 + $0x8] sm:$0xff] %v600
    %617 = vst [vmem:[#allocation5 + $0x10] sm:$0xff] %v601
    %618 = vst [vmem:[#allocation5 + $0x18] sm:$0xff] %v602
    %619 = vst [vmem:[#allocation5 + $0x20] sm:$0xff] %v603
    %620 = vst [vmem:[#allocation5 + $0x28] sm:$0xff] %v604
    %621 = vst [vmem:[#allocation5 + $0x30] sm:$0xff] %v605
    %622 = vst [vmem:[#allocation5 + $0x38] sm:$0xff] %v606
    %623 = vst [vmem:[#allocation5 + $0x40] sm:$0xff] %v607
    %624 = vst [vmem:[#allocation5 + $0x48] sm:$0xff] %v608
    %625 = vst [vmem:[#allocation5 + $0x50] sm:$0xff] %v609
    %626 = vst [vmem:[#allocation5 + $0x58] sm:$0xff] %v610
    %627 = vst [vmem:[#allocation5 + $0x60] sm:$0xff] %v611
    %628 = vst [vmem:[#allocation5 + $0x68] sm:$0xff] %v612
    %629 = vst [vmem:[#allocation5 + $0x70] sm:$0xff] %v613
    %630 = vst [vmem:[#allocation5 + $0x78] sm:$0xff] %v614
    // Predicated region
    $region26: #{tpu_custom_call.1} parent=1 // pred_check
      _
    $region27: #{tpu_custom_call.1} parent=1 // pred_check_branch
      %632 = sbr.rel (0) target = $region29
    $region28: #{tpu_custom_call.1} parent=1 // pred_region
      %s634 = ssub.s32 2048, 2048
      %635 = vsyncadd [#allocation4], %s634
      %s636 = sshll.u32 [#allocation5], 4
      %s637 = int_to_ptr.vmem [resolvable:$true] %s636
      %642 = dma.vmem_to_hbm [thread:$0]  %s637, 2048, %s5, [#allocation4], 512, 512, 32
    $region29: #{tpu_custom_call.1} parent=1 // pred_fallthru
      _
    // Predicated region
    $region30: #{tpu_custom_call.1} parent=1 // pred_check
      _
    $region31: #{tpu_custom_call.1} parent=1 // pred_check_branch
      %644 = sbr.rel (0) target = $region33
    $region32: #{tpu_custom_call.1} parent=1 // pred_region
      %645 = dma.done [#allocation4], 2048
    $region33: #{tpu_custom_call.1} parent=1 // pred_fallthru
      _
    %646 = vsyncpa [#allocation3], 1
    %647 = vsyncpa [#allocation4], 1

</llo_original>
